<compile_context>
chip_gen: v7x
topology: tpu7x:2x2x1
jax: 0.10.0
libtpu: 0.0.40
codegen_flags: <defaults>
</compile_context>

<pallas_src>
import functools

import jax
import jax.numpy as jnp
from jax.experimental import pallas as pl
from jax.experimental.pallas import tpu as pltpu


_LANE = 128
_SINGLE_TILE_MAX_ROWS = 1024   # below this, a single tile: grid steps are overhead


def _round_up(x, m):
    return ((x + m - 1) // m) * m


def _cdiv(a, b):
    return (a + b - 1) // b


def _mlp_kernel(s_ref, a_ref, w1s_ref, w1a_ref, b1_ref, w2_ref, b2_ref,
                w3_ref, b3_ref, o_ref):
    # Layer 1: split-input matmul (states/actions streamed separately), f32 accumulate.
    h1 = jnp.tanh(
        jnp.dot(s_ref[...], w1s_ref[...], preferred_element_type=jnp.float32)
        + jnp.dot(a_ref[...], w1a_ref[...], preferred_element_type=jnp.float32)
        + b1_ref[...]
    )
    # Layer 2: cast back to the streaming dtype so the MXU runs native bf16 passes
    # (no-op when compute_dtype=f32). If bundle dumps show the single EUP saturating
    # on v6e/v7x, the pre-activations could also be cast to bf16 before jnp.tanh
    # (~2x EUP throughput there; keep f32 tanh on v5e).
    h1 = h1.astype(w2_ref.dtype)
    h2 = jnp.tanh(
        jnp.dot(h1, w2_ref[...], preferred_element_type=jnp.float32) + b2_ref[...]
    )
    # Layer 3 (output dim 1): VPU multiply + lane reduction instead of an N=1 MXU pass.
    out = jnp.sum(h2 * w3_ref[...], axis=-1) + b3_ref[0]          # (tb,)
    o_ref[...] = out.reshape(o_ref.shape).astype(o_ref.dtype)     # lane-dense store


def prepare_params(params, state_dim, *, compute_dtype=jnp.bfloat16):
    """One-time param prep: split w1 by input, zero-pad hidden dims 100->128 lanes and
    cast the streamed operands (w1s/w1a/w2) to the compute dtype. Default is bf16
    streaming (the MXU is bf16-native on v5e/v6e/v7x); accumulation, biases and the
    tanh stay f32. Use compute_dtype=jnp.float32 for exact reference parity."""
    w1, b1, w2, b2, w3, b3 = params          # weights stored (in, out); biases (1, out)
    H1, H2 = w1.shape[1], w2.shape[1]
    Hp = _round_up(max(H1, H2), _LANE)       # 100 -> 128 (bit-identical padding)
    w1p = jnp.pad(w1, ((0, 0), (0, Hp - H1)))
    b1p = jnp.pad(b1, ((0, 0), (0, Hp - H1)))
    w2p = jnp.pad(w2, ((0, Hp - H1), (0, Hp - H2)))
    b2p = jnp.pad(b2, ((0, 0), (0, Hp - H2)))
    w3row = jnp.pad(w3.reshape(1, H2), ((0, 0), (0, Hp - H2)))   # (1, Hp)
    return (
        w1p[:state_dim].astype(compute_dtype),    # w1s: (state_dim, Hp)
        w1p[state_dim:].astype(compute_dtype),    # w1a: (action_dim, Hp)
        b1p.astype(jnp.float32),
        w2p.astype(compute_dtype),
        b2p.astype(jnp.float32),
        w3row.astype(jnp.float32),
        b3.reshape(1).astype(jnp.float32),        # scalar bias -> SMEM
    )


def _tile_plan(batch, block_b):
    """Pick a 128-aligned batch tile size and tile count.

    Small batches run as one tile (sequential grid steps are pure overhead on
    v5e/v6e). Large batches use >=2 tiles and an even tile count so the "parallel"
    grid axis load-balances v7x's two TensorCores.
    """
    b128 = _round_up(max(batch, 1), _LANE)
    tb_cap = max(_LANE, (block_b // _LANE) * _LANE)
    if b128 <= _SINGLE_TILE_MAX_ROWS:
        return b128, 1
    num_tiles = max(2, _cdiv(b128, tb_cap))
    if num_tiles % 2:
        num_tiles += 1
    tb = _round_up(_cdiv(b128, num_tiles), _LANE)
    num_tiles = _cdiv(b128, tb)
    if num_tiles % 2:
        num_tiles += 1            # one extra all-padding tile; negligible
    return tb, num_tiles


def _resident_spec(block_shape):
    """BlockSpec for weight/bias blocks whose index never changes across the grid:
    single-buffered (no redundant second VMEM copy / swap bookkeeping)."""
    index_map = lambda i: (0,) * len(block_shape)
    if hasattr(pl, "Buffered"):
        try:
            return pl.BlockSpec(block_shape, index_map, pipeline_mode=pl.Buffered(1))
        except Exception:   # older jax without pipeline_mode support: default buffering
            pass
    return pl.BlockSpec(block_shape, index_map)


@functools.partial(jax.jit, static_argnames=("block_b",))
def gail_discrim_forward(states, actions, log_pis, prepared_params, *, block_b=4096):
    """Pallas implementation of GAILDiscrim.forward with mu=None (log_pis unused)."""
    del log_pis  # unused: self.mu is None in this configuration
    w1s, w1a, b1, w2, b2, w3row, b3 = prepared_params
    B, S = states.shape
    A = actions.shape[1]
    Hp = w2.shape[1]

    tb, num_tiles = _tile_plan(B, block_b)
    B_pad = num_tiles * tb
    if B_pad != B:
        states = jnp.pad(states, ((0, B_pad - B), (0, 0)))
        actions = jnp.pad(actions, ((0, B_pad - B), (0, 0)))

    cd = w1s.dtype
    states = states.astype(cd)
    actions = actions.astype(cd)

    in_item = jnp.dtype(cd).itemsize
    weight_bytes = ((S + A) * Hp + Hp * Hp) * in_item + (3 * Hp + 1) * 4
    cost = pl.CostEstimate(
        flops=2 * B_pad * ((S + A) * Hp + Hp * Hp + Hp),
        transcendentals=2 * B_pad * Hp,
        bytes_accessed=B_pad * (S + A) * in_item + B_pad * 4 + weight_bytes,
    )

    # Explicit VMEM budget: double-buffered input/output tiles + resident weights +
    # the two (tb, Hp) f32 intermediates (with headroom), clamped under v7x's 64 MiB
    # physical VMEM. (v5e's default scoped limit is only 16 MiB.)
    vmem_bytes = (2 * tb * (S + A) * in_item      # input tiles, double-buffered
                  + 2 * tb * 4                    # output tiles, double-buffered
                  + 2 * weight_bytes              # weights (worst case x2)
                  + 4 * tb * Hp * 4               # h1/h2 intermediates + headroom
                  + (2 << 20))                    # fixed slack
    vmem_bytes = int(max(16 << 20, min(vmem_bytes, 48 << 20)))

    out = pl.pallas_call(
        _mlp_kernel,
        out_shape=jax.ShapeDtypeStruct((num_tiles, 1, tb), jnp.float32),
        grid_spec=pltpu.PrefetchScalarGridSpec(
            num_scalar_prefetch=0,
            grid=(num_tiles,),
            in_specs=[
                pl.BlockSpec((tb, S), lambda i: (i, 0)),            # states tile
                pl.BlockSpec((tb, A), lambda i: (i, 0)),            # actions tile
                _resident_spec((S, Hp)),                            # w1 (state half)
                _resident_spec((A, Hp)),                            # w1 (action half)
                _resident_spec((1, Hp)),                            # b1
                _resident_spec((Hp, Hp)),                           # w2
                _resident_spec((1, Hp)),                            # b2
                _resident_spec((1, Hp)),                            # w3 as a row
                pl.BlockSpec(memory_space=pltpu.MemorySpace.SMEM),  # b3 scalar
            ],
            out_specs=pl.BlockSpec((1, 1, tb), lambda i: (i, 0, 0)),  # lane-dense out
        ),
        compiler_params=pltpu.CompilerParams(
            dimension_semantics=("parallel",),
            vmem_limit_bytes=vmem_bytes,
        ),
        cost_estimate=cost,
    )(states, actions, w1s, w1a, b1, w2, b2, w3row, b3)

    return out.reshape(B_pad, 1)[:B]


def init_linear(key, fan_in, fan_out):
    # Deterministic init matching torch.nn.Linear default: U(-1/sqrt(fan_in), 1/sqrt(fan_in)).
    kw, kb = jax.random.split(key)
    bound = 1.0 / jnp.sqrt(jnp.float32(fan_in))
    # stored as (in, out) so the math is x @ W
    w = jax.random.uniform(kw, (fan_in, fan_out), jnp.float32, -bound, bound)
    b = jax.random.uniform(kb, (1, fan_out), jnp.float32, -bound, bound)
    return w, b


def reference_forward(states, actions, params):
    x = jnp.concatenate([states, actions], axis=-1)
    w1, b1, w2, b2, w3, b3 = params
    h1 = jnp.tanh(x @ w1 + b1)
    h2 = jnp.tanh(h1 @ w2 + b2)
    return h2 @ w3 + b3


if __name__ == "__main__":
    # Small, module-consistent shapes.
    B = 16
    state_dim = 16
    action_dim = 6
    hidden_units = (100, 100)
    D_in = state_dim + action_dim

    key = jax.random.PRNGKey(0)
    k_s, k_a, k_lp, k1, k2, k3 = jax.random.split(key, 6)

    states = jax.random.normal(k_s, (B, state_dim), jnp.float32)
    actions = jax.random.normal(k_a, (B, action_dim), jnp.float32)
    log_pis = jax.random.normal(k_lp, (B, 1), jnp.float32)  # unused (mu=None)

    w1, b1 = init_linear(k1, D_in, hidden_units[0])
    w2, b2 = init_linear(k2, hidden_units[0], hidden_units[1])
    w3, b3 = init_linear(k3, hidden_units[1], 1)
    params = (w1, b1, w2, b2, w3, b3)
    ref = reference_forward(states, actions, params)

    # 1) f32 path: exact parity with the reference (single tile at small B, per the
    #    perf guidance -- no block_b override).
    prepared_f32 = prepare_params(params, state_dim, compute_dtype=jnp.float32)
    out_f32 = jax.block_until_ready(
        gail_discrim_forward(states, actions, log_pis, prepared_f32))
    assert out_f32.shape == (B, 1)
    assert jnp.allclose(out_f32, ref, atol=1e-4, rtol=1e-4), (out_f32, ref)

    # 2) default bf16-streaming path (f32 accumulation): relaxed tolerance, the
    #    operand rounding is expected.
    prepared_bf16 = prepare_params(params, state_dim)
    out_bf16 = jax.block_until_ready(
        gail_discrim_forward(states, actions, log_pis, prepared_bf16))
    assert out_bf16.shape == (B, 1)
    assert jnp.allclose(out_bf16, ref, atol=1e-1, rtol=1e-1), (out_bf16, ref)

    # 3) larger batch (still tiny data) to exercise the multi-tile, even-count,
    #    megacore-parallel grid path with batch padding: f32 for an exact check.
    B_big = 2176
    kb_s, kb_a = jax.random.split(jax.random.PRNGKey(1))
    states_b = jax.random.normal(kb_s, (B_big, state_dim), jnp.float32)
    actions_b = jax.random.normal(kb_a, (B_big, action_dim), jnp.float32)
    ref_b = reference_forward(states_b, actions_b, params)
    out_b = jax.block_until_ready(
        gail_discrim_forward(states_b, actions_b, jnp.zeros((B_big, 1), jnp.float32),
                             prepared_f32))
    assert out_b.shape == (B_big, 1)
    assert jnp.allclose(out_b, ref_b, atol=1e-4, rtol=1e-4), (out_b, ref_b)

    # TODO(synk): calculate_reward (-logsigmoid(-forward)) and the mu-is-not-None
    # branch are outside the forward-pass spec here and are not implemented.
    print("KERNEL_OK")
</pallas_src>

<mosaic_0001>
module attributes {stable_mosaic.version = 11 : i64} {
  func.func @_mlp_kernel(%arg0: i32, %arg1: memref<128x16xf32, #tpu.memory_space<vmem>>, %arg2: memref<128x6xf32, #tpu.memory_space<vmem>>, %arg3: memref<16x128xf32, #tpu.memory_space<vmem>>, %arg4: memref<6x128xf32, #tpu.memory_space<vmem>>, %arg5: memref<1x128xf32, #tpu.memory_space<vmem>>, %arg6: memref<128x128xf32, #tpu.memory_space<vmem>>, %arg7: memref<1x128xf32, #tpu.memory_space<vmem>>, %arg8: memref<1x128xf32, #tpu.memory_space<vmem>>, %arg9: memref<1xf32, #tpu.memory_space<smem>>, %arg10: memref<1x1x128xf32, #tpu.memory_space<vmem>>) attributes {dimension_semantics = [#tpu.dimension_semantics<parallel>], iteration_bounds = array<i64: 1>, scalar_prefetch = 0 : i64, scratch_operands = 0 : i64, tpu.core_type = #tpu.core_type<tc>, window_params = [{transform_indices = @transform_0, window_bounds = array<i64: 128, 16>}, {transform_indices = @transform_1, window_bounds = array<i64: 128, 6>}, {pipeline_mode = #tpu.pipeline_mode<synchronous>, transform_indices = @transform_2, window_bounds = array<i64: 16, 128>}, {pipeline_mode = #tpu.pipeline_mode<synchronous>, transform_indices = @transform_3, window_bounds = array<i64: 6, 128>}, {pipeline_mode = #tpu.pipeline_mode<synchronous>, transform_indices = @transform_4, window_bounds = array<i64: 1, 128>}, {pipeline_mode = #tpu.pipeline_mode<synchronous>, transform_indices = @transform_5, window_bounds = array<i64: 128, 128>}, {pipeline_mode = #tpu.pipeline_mode<synchronous>, transform_indices = @transform_6, window_bounds = array<i64: 1, 128>}, {pipeline_mode = #tpu.pipeline_mode<synchronous>, transform_indices = @transform_7, window_bounds = array<i64: 1, 128>}, {transform_indices = @transform_8, window_bounds = array<i64: 1>}, {transform_indices = @transform_9, window_bounds = array<i64: 1, 1, 128>}]} {
    %c0 = arith.constant 0 : index
    %c0_0 = arith.constant 0 : index
    %0 = vector.load %arg1[%c0, %c0_0] : memref<128x16xf32, #tpu.memory_space<vmem>>, vector<128x16xf32>
    %c0_1 = arith.constant 0 : index
    %c0_2 = arith.constant 0 : index
    %1 = vector.load %arg3[%c0_1, %c0_2] : memref<16x128xf32, #tpu.memory_space<vmem>>, vector<16x128xf32>
    %cst = arith.constant dense<0.000000e+00> : vector<128x128xf32>
    %2 = tpu.matmul %0, %1, %cst {dimension_numbers = #tpu.dot_dimension_numbers<[1], [0], [0], [1], [0, 0, 1, 1], [], []>} : vector<128x16xf32>, vector<16x128xf32>, vector<128x128xf32> -> vector<128x128xf32>
    %c0_3 = arith.constant 0 : index
    %c0_4 = arith.constant 0 : index
    %3 = vector.load %arg2[%c0_3, %c0_4] : memref<128x6xf32, #tpu.memory_space<vmem>>, vector<128x6xf32>
    %c0_5 = arith.constant 0 : index
    %c0_6 = arith.constant 0 : index
    %4 = vector.load %arg4[%c0_5, %c0_6] : memref<6x128xf32, #tpu.memory_space<vmem>>, vector<6x128xf32>
    %cst_7 = arith.constant dense<0.000000e+00> : vector<128x128xf32>
    %5 = tpu.matmul %3, %4, %cst_7 {dimension_numbers = #tpu.dot_dimension_numbers<[1], [0], [0], [1], [0, 0, 1, 1], [], []>} : vector<128x6xf32>, vector<6x128xf32>, vector<128x128xf32> -> vector<128x128xf32>
    %6 = arith.addf %2, %5 : vector<128x128xf32>
    %c0_8 = arith.constant 0 : index
    %c0_9 = arith.constant 0 : index
    %7 = vector.load %arg5[%c0_8, %c0_9] : memref<1x128xf32, #tpu.memory_space<vmem>>, vector<1x128xf32>
    %8 = vector.broadcast %7 : vector<1x128xf32> to vector<128x128xf32>
    %9 = arith.addf %6, %8 : vector<128x128xf32>
    %10 = math.tanh %9 : vector<128x128xf32>
    %c0_10 = arith.constant 0 : index
    %c0_11 = arith.constant 0 : index
    %11 = vector.load %arg6[%c0_10, %c0_11] : memref<128x128xf32, #tpu.memory_space<vmem>>, vector<128x128xf32>
    %cst_12 = arith.constant dense<0.000000e+00> : vector<128x128xf32>
    %12 = tpu.matmul %10, %11, %cst_12 {dimension_numbers = #tpu.dot_dimension_numbers<[1], [0], [0], [1], [0, 0, 1, 1], [], []>} : vector<128x128xf32>, vector<128x128xf32>, vector<128x128xf32> -> vector<128x128xf32>
    %c0_13 = arith.constant 0 : index
    %c0_14 = arith.constant 0 : index
    %13 = vector.load %arg7[%c0_13, %c0_14] : memref<1x128xf32, #tpu.memory_space<vmem>>, vector<1x128xf32>
    %14 = vector.broadcast %13 : vector<1x128xf32> to vector<128x128xf32>
    %15 = arith.addf %12, %14 : vector<128x128xf32>
    %16 = math.tanh %15 : vector<128x128xf32>
    %c0_15 = arith.constant 0 : index
    %c0_16 = arith.constant 0 : index
    %17 = vector.load %arg8[%c0_15, %c0_16] : memref<1x128xf32, #tpu.memory_space<vmem>>, vector<1x128xf32>
    %18 = vector.broadcast %17 : vector<1x128xf32> to vector<128x128xf32>
    %19 = arith.mulf %16, %18 : vector<128x128xf32>
    %cst_17 = arith.constant dense<0.000000e+00> : vector<128xf32>
    %20 = vector.multi_reduction <add>, %19, %cst_17 [1] : vector<128x128xf32> to vector<128xf32>
    %c0_18 = arith.constant 0 : index
    %21 = memref.load %arg9[%c0_18] : memref<1xf32, #tpu.memory_space<smem>>
    %22 = vector.broadcast %21 : f32 to vector<128xf32>
    %23 = arith.addf %20, %22 : vector<128xf32>
    %24 = vector.shape_cast %23 : vector<128xf32> to vector<1x1x128xf32>
    %c0_19 = arith.constant 0 : index
    %c0_20 = arith.constant 0 : index
    %c0_21 = arith.constant 0 : index
    %25 = vector.load %arg10[%c0_19, %c0_20, %c0_21] : memref<1x1x128xf32, #tpu.memory_space<vmem>>, vector<1x1x128xf32>
    tpu.vector_store %arg10[%c0_19, %c0_20, %c0_21], %24 {strides = array<i32>} : memref<1x1x128xf32, #tpu.memory_space<vmem>>, vector<1x1x128xf32>,
    return
  }
  func.func @transform_0(%arg0: i32) -> (i32, i32) {
    %c0_i32 = arith.constant 0 : i32
    %c0_i32_0 = arith.constant 0 : i32
    return %arg0, %c0_i32 : i32, i32
  }
  func.func @transform_1(%arg0: i32) -> (i32, i32) {
    %c0_i32 = arith.constant 0 : i32
    %c0_i32_0 = arith.constant 0 : i32
    return %arg0, %c0_i32 : i32, i32
  }
  func.func @transform_2(%arg0: i32) -> (i32, i32) {
    %c0_i32 = arith.constant 0 : i32
    %c0_i32_0 = arith.constant 0 : i32
    %c0_i32_1 = arith.constant 0 : i32
    return %c0_i32, %c0_i32_0 : i32, i32
  }
  func.func @transform_3(%arg0: i32) -> (i32, i32) {
    %c0_i32 = arith.constant 0 : i32
    %c0_i32_0 = arith.constant 0 : i32
    %c0_i32_1 = arith.constant 0 : i32
    return %c0_i32, %c0_i32_0 : i32, i32
  }
  func.func @transform_4(%arg0: i32) -> (i32, i32) {
    %c0_i32 = arith.constant 0 : i32
    %c0_i32_0 = arith.constant 0 : i32
    %c0_i32_1 = arith.constant 0 : i32
    return %c0_i32, %c0_i32_0 : i32, i32
  }
  func.func @transform_5(%arg0: i32) -> (i32, i32) {
    %c0_i32 = arith.constant 0 : i32
    %c0_i32_0 = arith.constant 0 : i32
    %c0_i32_1 = arith.constant 0 : i32
    return %c0_i32, %c0_i32_0 : i32, i32
  }
  func.func @transform_6(%arg0: i32) -> (i32, i32) {
    %c0_i32 = arith.constant 0 : i32
    %c0_i32_0 = arith.constant 0 : i32
    %c0_i32_1 = arith.constant 0 : i32
    return %c0_i32, %c0_i32_0 : i32, i32
  }
  func.func @transform_7(%arg0: i32) -> (i32, i32) {
    %c0_i32 = arith.constant 0 : i32
    %c0_i32_0 = arith.constant 0 : i32
    %c0_i32_1 = arith.constant 0 : i32
    return %c0_i32, %c0_i32_0 : i32, i32
  }
  func.func @transform_8(%arg0: i32) -> i32 {
    %c0_i32 = arith.constant 0 : i32
    %c0_i32_0 = arith.constant 0 : i32
    return %c0_i32 : i32
  }
  func.func @transform_9(%arg0: i32) -> (i32, i32, i32) {
    %c0_i32 = arith.constant 0 : i32
    %c0_i32_0 = arith.constant 0 : i32
    %c0_i32_1 = arith.constant 0 : i32
    return %arg0, %c0_i32, %c0_i32_0 : i32, i32, i32
  }
}

</mosaic_0001>

<llo_original>
// kernel: gail_discrim_forward.1
$region0: #{gail_discrim_forward.1}
  #allocation0 [shape = 'u32[]', space=smem, size = 0x4, offset = 0x4, fixed_abs, tag = 'smem constant byte address 0x4 - core index']
  #allocation1 [shape = 'u32[144,128]{1,0:T(1,128)}', space=vmem, size = 0x12000, scoped, tag = 'internal scratch']
  #allocation2 [shape = 'f32[1]{0:T(128)S(6)}', space=smem, size = 0x200, scoped, tag = 'scoped memory for gail_discrim_forward.1']
  %s0 = inlined_call_operand.vmem [shape: f32[128,16], index: 0, kind: input, shape index: {}]
  %s1 = inlined_call_operand.vmem [shape: f32[128,6], index: 1, kind: input, shape index: {}]
  %s2 = inlined_call_operand.vmem [shape: f32[16,128], index: 2, kind: input, shape index: {}]
  %s3 = inlined_call_operand.vmem [shape: f32[6,128], index: 3, kind: input, shape index: {}]
  %s4 = inlined_call_operand.vmem [shape: f32[1,128], index: 4, kind: input, shape index: {}]
  %s5 = inlined_call_operand.vmem [shape: f32[128,128], index: 5, kind: input, shape index: {}]
  %s6 = inlined_call_operand.vmem [shape: f32[1,128], index: 6, kind: input, shape index: {}]
  %s7 = inlined_call_operand.vmem [shape: f32[1,128], index: 7, kind: input, shape index: {}]
  %s8 = inlined_call_operand.<no memory space> [shape: f32[1], index: 8, kind: input, shape index: {}]
  %s9 = inlined_call_operand.vmem [shape: f32[1,1,128], index: 9, kind: output, shape index: {}]
  %s10 = sld [smem:[#allocation0]]
  $region46: #{gail_discrim_forward.1} parent=0
    _
  %s12 = ssub.s32 1, %s10
  %s13 = scalar_select 0, %s12, %s10
  %14 = sst [smem:[#allocation2]] %s8
  // Predicated region
  $region2: #{gail_discrim_forward.1} parent=0 // pred_check
    _
  $region3: #{gail_discrim_forward.1} parent=0 // pred_check_branch
    %16 = sbr.rel (0) target = $region5
  $region4: #{gail_discrim_forward.1} parent=0 // pred_region
    _
  $region5: #{gail_discrim_forward.1} parent=0 // pred_fallthru
    _
  // Predicated region
  $region6: #{gail_discrim_forward.1} parent=0 // pred_check
    _
  $region7: #{gail_discrim_forward.1} parent=0 // pred_check_branch
    %18 = sbr.rel (0) target = $region9
  $region8: #{gail_discrim_forward.1} parent=0 // pred_region
    _
  $region9: #{gail_discrim_forward.1} parent=0 // pred_fallthru
    _
  // Predicated region
  $region10: #{gail_discrim_forward.1} parent=0 // pred_check
    _
  $region11: #{gail_discrim_forward.1} parent=0 // pred_check_branch
    %20 = sbr.rel (0) target = $region13
  $region12: #{gail_discrim_forward.1} parent=0 // pred_region
    _
  $region13: #{gail_discrim_forward.1} parent=0 // pred_fallthru
    _
  // Predicated region
  $region14: #{gail_discrim_forward.1} parent=0 // pred_check
    _
  $region15: #{gail_discrim_forward.1} parent=0 // pred_check_branch
    %22 = sbr.rel (0) target = $region17
  $region16: #{gail_discrim_forward.1} parent=0 // pred_region
    _
  $region17: #{gail_discrim_forward.1} parent=0 // pred_fallthru
    _
  // Predicated region
  $region18: #{gail_discrim_forward.1} parent=0 // pred_check
    _
  $region19: #{gail_discrim_forward.1} parent=0 // pred_check_branch
    %24 = sbr.rel (0) target = $region21
  $region20: #{gail_discrim_forward.1} parent=0 // pred_region
    _
  $region21: #{gail_discrim_forward.1} parent=0 // pred_fallthru
    _
  // Predicated region
  $region22: #{gail_discrim_forward.1} parent=0 // pred_check
    _
  $region23: #{gail_discrim_forward.1} parent=0 // pred_check_branch
    %26 = sbr.rel (0) target = $region25
  $region24: #{gail_discrim_forward.1} parent=0 // pred_region
    _
  $region25: #{gail_discrim_forward.1} parent=0 // pred_fallthru
    _
  // Predicated region
  $region26: #{gail_discrim_forward.1} parent=0 // pred_check
    _
  $region27: #{gail_discrim_forward.1} parent=0 // pred_check_branch
    %28 = sbr.rel (0) target = $region29
  $region28: #{gail_discrim_forward.1} parent=0 // pred_region
    _
  $region29: #{gail_discrim_forward.1} parent=0 // pred_fallthru
    _
  // Predicated region
  $region30: #{gail_discrim_forward.1} parent=0 // pred_check
    _
  $region31: #{gail_discrim_forward.1} parent=0 // pred_check_branch
    %30 = sbr.rel (0) target = $region33
  $region32: #{gail_discrim_forward.1} parent=0 // pred_region
    _
  $region33: #{gail_discrim_forward.1} parent=0 // pred_fallthru
    _
  // Predicated region
  $region34: #{gail_discrim_forward.1} parent=0 // pred_check
    _
  $region35: #{gail_discrim_forward.1} parent=0 // pred_check_branch
    %32 = sbr.rel (0) target = $region37
  $region36: #{gail_discrim_forward.1} parent=0 // pred_region
    _
  $region37: #{gail_discrim_forward.1} parent=0 // pred_fallthru
    _
  %v33 = vld [vmem:[%s0] sm:$0xff]
  %v34 = vld [vmem:[%s0 + $0x8] sm:$0xff]
  %v35 = vld [vmem:[%s0 + $0x10] sm:$0xff]
  %v36 = vld [vmem:[%s0 + $0x18] sm:$0xff]
  %v37 = vld [vmem:[%s0 + $0x20] sm:$0xff]
  %v38 = vld [vmem:[%s0 + $0x28] sm:$0xff]
  %v39 = vld [vmem:[%s0 + $0x30] sm:$0xff]
  %v40 = vld [vmem:[%s0 + $0x38] sm:$0xff]
  %v41 = vld [vmem:[%s0 + $0x40] sm:$0xff]
  %v42 = vld [vmem:[%s0 + $0x48] sm:$0xff]
  %v43 = vld [vmem:[%s0 + $0x50] sm:$0xff]
  %v44 = vld [vmem:[%s0 + $0x58] sm:$0xff]
  %v45 = vld [vmem:[%s0 + $0x60] sm:$0xff]
  %v46 = vld [vmem:[%s0 + $0x68] sm:$0xff]
  %v47 = vld [vmem:[%s0 + $0x70] sm:$0xff]
  %v48 = vld [vmem:[%s0 + $0x78] sm:$0xff]
  %v49 = vld [vmem:[%s2] sm:$0xff]
  %v50 = vld [vmem:[%s2 + $0x8] sm:$0xff]
  %v51 = vld [vmem:[%s1] sm:$0xff]
  %v52 = vld [vmem:[%s1 + $0x8] sm:$0xff]
  %v53 = vld [vmem:[%s1 + $0x10] sm:$0xff]
  %v54 = vld [vmem:[%s1 + $0x18] sm:$0xff]
  %v55 = vld [vmem:[%s1 + $0x20] sm:$0xff]
  %v56 = vld [vmem:[%s1 + $0x28] sm:$0xff]
  %v57 = vld [vmem:[%s1 + $0x30] sm:$0xff]
  %v58 = vld [vmem:[%s1 + $0x38] sm:$0xff]
  %v59 = vld [vmem:[%s1 + $0x40] sm:$0xff]
  %v60 = vld [vmem:[%s1 + $0x48] sm:$0xff]
  %v61 = vld [vmem:[%s1 + $0x50] sm:$0xff]
  %v62 = vld [vmem:[%s1 + $0x58] sm:$0xff]
  %v63 = vld [vmem:[%s1 + $0x60] sm:$0xff]
  %v64 = vld [vmem:[%s1 + $0x68] sm:$0xff]
  %v65 = vld [vmem:[%s1 + $0x70] sm:$0xff]
  %v66 = vld [vmem:[%s1 + $0x78] sm:$0xff]
  %v67 = vld [vmem:[%s3] sm:$0x3f]
  %vm68 = vcmask 48128
  %v70 = vsel %vm68, %v51, 0
  %v73 = vsel %vm68, %v52, 0
  %v76 = vsel %vm68, %v53, 0
  %v79 = vsel %vm68, %v54, 0
  %v82 = vsel %vm68, %v55, 0
  %v85 = vsel %vm68, %v56, 0
  %v88 = vsel %vm68, %v57, 0
  %v91 = vsel %vm68, %v58, 0
  %v94 = vsel %vm68, %v59, 0
  %v97 = vsel %vm68, %v60, 0
  %v100 = vsel %vm68, %v61, 0
  %v103 = vsel %vm68, %v62, 0
  %v106 = vsel %vm68, %v63, 0
  %v109 = vsel %vm68, %v64, 0
  %v112 = vsel %vm68, %v65, 0
  %v115 = vsel %vm68, %v66, 0
  %vm117 = vcmask 1045504
  %v119 = vsel %vm117, %v67, 0
  %121 = vmatprep.subr.mxu0 0.0
  %122 = vmatpush1.msra.mxu0 %v119
  %123 = vmatprep.subr.mxu0 0.0
  %124 = vmatpush1.msra.mxu0 0.0
  %125 = vmatprep.subr.mxu0 0.0
  %126 = vmatpush1.msra.mxu0 0.0
  %127 = vmatprep.subr.mxu0 0.0
  %128 = vmatpush1.msra.mxu0 0.0
  %129 = vmatprep.subr.mxu0 0.0
  %130 = vmatpush1.msra.mxu0 0.0
  %131 = vmatprep.subr.mxu0 0.0
  %132 = vmatpush1.msra.mxu0 0.0
  %133 = vmatprep.subr.mxu0 0.0
  %134 = vmatpush1.msra.mxu0 0.0
  %135 = vmatprep.subr.mxu0 0.0
  %136 = vmatpush1.msra.mxu0 0.0
  %137 = vmatprep.subr.mxu0 0.0
  %138 = vmatpush1.msra.mxu0 0.0
  %139 = vmatprep.subr.mxu0 0.0
  %140 = vmatpush1.msra.mxu0 0.0
  %141 = vmatprep.subr.mxu0 0.0
  %142 = vmatpush1.msra.mxu0 0.0
  %143 = vmatprep.subr.mxu0 0.0
  %144 = vmatpush1.msra.mxu0 0.0
  %145 = vmatprep.subr.mxu0 0.0
  %146 = vmatpush1.msra.mxu0 0.0
  %147 = vmatprep.subr.mxu0 0.0
  %148 = vmatpush1.msra.mxu0 0.0
  %149 = vmatprep.subr.mxu0 0.0
  %150 = vmatpush1.msra.mxu0 0.0
  %151 = vmatprep.subr.mxu0 0.0
  %152 = vmatpush1.msra.mxu0 0.0
  %153 = vmatprep.subr.mxu0 0.0
  %154 = vmatpush1.msra.mxu0 0.0
  %155 = vmatprep.subr.mxu0 0.0
  %156 = vmatpush1.msra.mxu0 0.0
  %157 = vmatprep.subr.mxu0 0.0
  %158 = vmatpush1.msra.mxu0 0.0
  %159 = vmatprep.subr.mxu0 0.0
  %160 = vmatpush1.msra.mxu0 0.0
  %161 = vmatprep.subr.mxu0 0.0
  %162 = vmatpush1.msra.mxu0 0.0
  %163 = vmatprep.subr.mxu0 0.0
  %164 = vmatpush1.msra.mxu0 0.0
  %165 = vmatprep.subr.mxu0 0.0
  %166 = vmatpush1.msra.mxu0 0.0
  %167 = vmatprep.subr.mxu0 0.0
  %168 = vmatpush1.msra.mxu0 0.0
  %169 = vmatprep.subr.mxu0 0.0
  %170 = vmatpush1.msra.mxu0 0.0
  %171 = vmatprep.subr.mxu0 0.0
  %172 = vmatpush1.msra.mxu0 0.0
  %173 = vmatprep.subr.mxu0 0.0
  %174 = vmatpush1.msra.mxu0 0.0
  %175 = vmatprep.subr.mxu0 0.0
  %176 = vmatpush1.msra.mxu0 0.0
  %177 = vmatprep.subr.mxu0 0.0
  %178 = vmatpush1.msra.mxu0 0.0
  %179 = vmatprep.subr.mxu0 0.0
  %180 = vmatpush1.msra.mxu0 0.0
  %181 = vmatprep.subr.mxu0 0.0
  %182 = vmatpush1.msra.mxu0 0.0
  %183 = vmatprep.subr.mxu0 0.0
  %184 = vmatpush1.msra.mxu0 0.0
  %185 = vmatprep.mubr.f32.mxu0 0.0
  %186 = vmatmul.mubr.f32.gmra.mrb[0].mxu0 %v70
  %v187 = vpop.f32.mrb[0].mxu0
  %v188 = vadd.f32 0.0, %v187
  %v189 = vpop.f32.mrb[0].mxu0
  %190 = vmatprep.mubr.f32.mxu0 0.0
  %191 = vmatmul.mubr.f32.gmra.mrb[0].mxu0 %v73
  %v192 = vpop.f32.mrb[0].mxu0
  %v193 = vadd.f32 0.0, %v192
  %v194 = vpop.f32.mrb[0].mxu0
  %195 = vmatprep.mubr.f32.mxu0 0.0
  %196 = vmatmul.mubr.f32.gmra.mrb[0].mxu0 %v76
  %v197 = vpop.f32.mrb[0].mxu0
  %v198 = vadd.f32 0.0, %v197
  %v199 = vpop.f32.mrb[0].mxu0
  %200 = vmatprep.mubr.f32.mxu0 0.0
  %201 = vmatmul.mubr.f32.gmra.mrb[0].mxu0 %v79
  %v202 = vpop.f32.mrb[0].mxu0
  %v203 = vadd.f32 0.0, %v202
  %v204 = vpop.f32.mrb[0].mxu0
  %205 = vmatprep.mubr.f32.mxu0 0.0
  %206 = vmatmul.mubr.f32.gmra.mrb[0].mxu0 %v82
  %v207 = vpop.f32.mrb[0].mxu0
  %v208 = vadd.f32 0.0, %v207
  %v209 = vpop.f32.mrb[0].mxu0
  %210 = vmatprep.mubr.f32.mxu0 0.0
  %211 = vmatmul.mubr.f32.gmra.mrb[0].mxu0 %v85
  %v212 = vpop.f32.mrb[0].mxu0
  %v213 = vadd.f32 0.0, %v212
  %v214 = vpop.f32.mrb[0].mxu0
  %215 = vmatprep.mubr.f32.mxu0 0.0
  %216 = vmatmul.mubr.f32.gmra.mrb[0].mxu0 %v88
  %v217 = vpop.f32.mrb[0].mxu0
  %v218 = vadd.f32 0.0, %v217
  %v219 = vpop.f32.mrb[0].mxu0
  %220 = vmatprep.mubr.f32.mxu0 0.0
  %221 = vmatmul.mubr.f32.gmra.mrb[0].mxu0 %v91
  %v222 = vpop.f32.mrb[0].mxu0
  %v223 = vadd.f32 0.0, %v222
  %v224 = vpop.f32.mrb[0].mxu0
  %225 = vmatprep.mubr.f32.mxu0 0.0
  %226 = vmatmul.mubr.f32.gmra.mrb[0].mxu0 %v94
  %v227 = vpop.f32.mrb[0].mxu0
  %v228 = vadd.f32 0.0, %v227
  %v229 = vpop.f32.mrb[0].mxu0
  %230 = vmatprep.mubr.f32.mxu0 0.0
  %231 = vmatmul.mubr.f32.gmra.mrb[0].mxu0 %v97
  %v232 = vpop.f32.mrb[0].mxu0
  %v233 = vadd.f32 0.0, %v232
  %v234 = vpop.f32.mrb[0].mxu0
  %235 = vmatprep.mubr.f32.mxu0 0.0
  %236 = vmatmul.mubr.f32.gmra.mrb[0].mxu0 %v100
  %v237 = vpop.f32.mrb[0].mxu0
  %v238 = vadd.f32 0.0, %v237
  %v239 = vpop.f32.mrb[0].mxu0
  %240 = vmatprep.mubr.f32.mxu0 0.0
  %241 = vmatmul.mubr.f32.gmra.mrb[0].mxu0 %v103
  %v242 = vpop.f32.mrb[0].mxu0
  %v243 = vadd.f32 0.0, %v242
  %v244 = vpop.f32.mrb[0].mxu0
  %245 = vmatprep.mubr.f32.mxu0 0.0
  %246 = vmatmul.mubr.f32.gmra.mrb[0].mxu0 %v106
  %v247 = vpop.f32.mrb[0].mxu0
  %v248 = vadd.f32 0.0, %v247
  %v249 = vpop.f32.mrb[0].mxu0
  %250 = vmatprep.mubr.f32.mxu0 0.0
  %251 = vmatmul.mubr.f32.gmra.mrb[0].mxu0 %v109
  %v252 = vpop.f32.mrb[0].mxu0
  %v253 = vadd.f32 0.0, %v252
  %v254 = vpop.f32.mrb[0].mxu0
  %255 = vmatprep.mubr.f32.mxu0 0.0
  %256 = vmatmul.mubr.f32.gmra.mrb[0].mxu0 %v112
  %v257 = vpop.f32.mrb[0].mxu0
  %v258 = vadd.f32 0.0, %v257
  %v259 = vpop.f32.mrb[0].mxu0
  %260 = vmatprep.mubr.f32.mxu0 0.0
  %261 = vmatmul.mubr.f32.gmra.mrb[0].mxu0 %v115
  %v262 = vpop.f32.mrb[0].mxu0
  %v263 = vadd.f32 0.0, %v262
  %v264 = vpop.f32.mrb[0].mxu0
  %265 = vdwg.mxu0
  %vm266 = vcmask 130048
  %v268 = vsel %vm266, %v33, 0
  %v271 = vsel %vm266, %v34, 0
  %v274 = vsel %vm266, %v35, 0
  %v277 = vsel %vm266, %v36, 0
  %v280 = vsel %vm266, %v37, 0
  %v283 = vsel %vm266, %v38, 0
  %v286 = vsel %vm266, %v39, 0
  %v289 = vsel %vm266, %v40, 0
  %v292 = vsel %vm266, %v41, 0
  %v295 = vsel %vm266, %v42, 0
  %v298 = vsel %vm266, %v43, 0
  %v301 = vsel %vm266, %v44, 0
  %v304 = vsel %vm266, %v45, 0
  %v307 = vsel %vm266, %v46, 0
  %v310 = vsel %vm266, %v47, 0
  %v313 = vsel %vm266, %v48, 0
  %315 = vmatprep.subr.mxu0 0.0
  %316 = vmatpush1.msra.mxu0 %v49
  %317 = vmatprep.subr.mxu0 0.0
  %318 = vmatpush1.msra.mxu0 %v50
  %319 = vmatprep.subr.mxu0 0.0
  %320 = vmatpush1.msra.mxu0 0.0
  %321 = vmatprep.subr.mxu0 0.0
  %322 = vmatpush1.msra.mxu0 0.0
  %323 = vmatprep.subr.mxu0 0.0
  %324 = vmatpush1.msra.mxu0 0.0
  %325 = vmatprep.subr.mxu0 0.0
  %326 = vmatpush1.msra.mxu0 0.0
  %327 = vmatprep.subr.mxu0 0.0
  %328 = vmatpush1.msra.mxu0 0.0
  %329 = vmatprep.subr.mxu0 0.0
  %330 = vmatpush1.msra.mxu0 0.0
  %331 = vmatprep.subr.mxu0 0.0
  %332 = vmatpush1.msra.mxu0 0.0
  %333 = vmatprep.subr.mxu0 0.0
  %334 = vmatpush1.msra.mxu0 0.0
  %335 = vmatprep.subr.mxu0 0.0
  %336 = vmatpush1.msra.mxu0 0.0
  %337 = vmatprep.subr.mxu0 0.0
  %338 = vmatpush1.msra.mxu0 0.0
  %339 = vmatprep.subr.mxu0 0.0
  %340 = vmatpush1.msra.mxu0 0.0
  %341 = vmatprep.subr.mxu0 0.0
  %342 = vmatpush1.msra.mxu0 0.0
  %343 = vmatprep.subr.mxu0 0.0
  %344 = vmatpush1.msra.mxu0 0.0
  %345 = vmatprep.subr.mxu0 0.0
  %346 = vmatpush1.msra.mxu0 0.0
  %347 = vmatprep.subr.mxu0 0.0
  %348 = vmatpush1.msra.mxu0 0.0
  %349 = vmatprep.subr.mxu0 0.0
  %350 = vmatpush1.msra.mxu0 0.0
  %351 = vmatprep.subr.mxu0 0.0
  %352 = vmatpush1.msra.mxu0 0.0
  %353 = vmatprep.subr.mxu0 0.0
  %354 = vmatpush1.msra.mxu0 0.0
  %355 = vmatprep.subr.mxu0 0.0
  %356 = vmatpush1.msra.mxu0 0.0
  %357 = vmatprep.subr.mxu0 0.0
  %358 = vmatpush1.msra.mxu0 0.0
  %359 = vmatprep.subr.mxu0 0.0
  %360 = vmatpush1.msra.mxu0 0.0
  %361 = vmatprep.subr.mxu0 0.0
  %362 = vmatpush1.msra.mxu0 0.0
  %363 = vmatprep.subr.mxu0 0.0
  %364 = vmatpush1.msra.mxu0 0.0
  %365 = vmatprep.subr.mxu0 0.0
  %366 = vmatpush1.msra.mxu0 0.0
  %367 = vmatprep.subr.mxu0 0.0
  %368 = vmatpush1.msra.mxu0 0.0
  %369 = vmatprep.subr.mxu0 0.0
  %370 = vmatpush1.msra.mxu0 0.0
  %371 = vmatprep.subr.mxu0 0.0
  %372 = vmatpush1.msra.mxu0 0.0
  %373 = vmatprep.subr.mxu0 0.0
  %374 = vmatpush1.msra.mxu0 0.0
  %375 = vmatprep.subr.mxu0 0.0
  %376 = vmatpush1.msra.mxu0 0.0
  %377 = vmatprep.subr.mxu0 0.0
  %378 = vmatpush1.msra.mxu0 0.0
  %379 = vmatprep.mubr.f32.mxu0 0.0
  %380 = vmatmul.mubr.f32.gmra.mrb[0].mxu0 %v268
  %v381 = vpop.f32.mrb[0].mxu0
  %v382 = vadd.f32 %v188, %v381
  %v383 = vpop.f32.mrb[0].mxu0
  %384 = vmatprep.mubr.f32.mxu0 0.0
  %385 = vmatmul.mubr.f32.gmra.mrb[0].mxu0 %v271
  %v386 = vpop.f32.mrb[0].mxu0
  %v387 = vadd.f32 %v193, %v386
  %v388 = vpop.f32.mrb[0].mxu0
  %389 = vmatprep.mubr.f32.mxu0 0.0
  %390 = vmatmul.mubr.f32.gmra.mrb[0].mxu0 %v274
  %v391 = vpop.f32.mrb[0].mxu0
  %v392 = vadd.f32 %v198, %v391
  %v393 = vpop.f32.mrb[0].mxu0
  %394 = vmatprep.mubr.f32.mxu0 0.0
  %395 = vmatmul.mubr.f32.gmra.mrb[0].mxu0 %v277
  %v396 = vpop.f32.mrb[0].mxu0
  %v397 = vadd.f32 %v203, %v396
  %v398 = vpop.f32.mrb[0].mxu0
  %399 = vmatprep.mubr.f32.mxu0 0.0
  %400 = vmatmul.mubr.f32.gmra.mrb[0].mxu0 %v280
  %v401 = vpop.f32.mrb[0].mxu0
  %v402 = vadd.f32 %v208, %v401
  %v403 = vpop.f32.mrb[0].mxu0
  %404 = vmatprep.mubr.f32.mxu0 0.0
  %405 = vmatmul.mubr.f32.gmra.mrb[0].mxu0 %v283
  %v406 = vpop.f32.mrb[0].mxu0
  %v407 = vadd.f32 %v213, %v406
  %v408 = vpop.f32.mrb[0].mxu0
  %409 = vmatprep.mubr.f32.mxu0 0.0
  %410 = vmatmul.mubr.f32.gmra.mrb[0].mxu0 %v286
  %v411 = vpop.f32.mrb[0].mxu0
  %v412 = vadd.f32 %v218, %v411
  %v413 = vpop.f32.mrb[0].mxu0
  %414 = vmatprep.mubr.f32.mxu0 0.0
  %415 = vmatmul.mubr.f32.gmra.mrb[0].mxu0 %v289
  %v416 = vpop.f32.mrb[0].mxu0
  %v417 = vadd.f32 %v223, %v416
  %v418 = vpop.f32.mrb[0].mxu0
  %419 = vmatprep.mubr.f32.mxu0 0.0
  %420 = vmatmul.mubr.f32.gmra.mrb[0].mxu0 %v292
  %v421 = vpop.f32.mrb[0].mxu0
  %v422 = vadd.f32 %v228, %v421
  %v423 = vpop.f32.mrb[0].mxu0
  %424 = vmatprep.mubr.f32.mxu0 0.0
  %425 = vmatmul.mubr.f32.gmra.mrb[0].mxu0 %v295
  %v426 = vpop.f32.mrb[0].mxu0
  %v427 = vadd.f32 %v233, %v426
  %v428 = vpop.f32.mrb[0].mxu0
  %429 = vmatprep.mubr.f32.mxu0 0.0
  %430 = vmatmul.mubr.f32.gmra.mrb[0].mxu0 %v298
  %v431 = vpop.f32.mrb[0].mxu0
  %v432 = vadd.f32 %v238, %v431
  %v433 = vpop.f32.mrb[0].mxu0
  %434 = vmatprep.mubr.f32.mxu0 0.0
  %435 = vmatmul.mubr.f32.gmra.mrb[0].mxu0 %v301
  %v436 = vpop.f32.mrb[0].mxu0
  %v437 = vadd.f32 %v243, %v436
  %v438 = vpop.f32.mrb[0].mxu0
  %439 = vmatprep.mubr.f32.mxu0 0.0
  %440 = vmatmul.mubr.f32.gmra.mrb[0].mxu0 %v304
  %v441 = vpop.f32.mrb[0].mxu0
  %v442 = vadd.f32 %v248, %v441
  %v443 = vpop.f32.mrb[0].mxu0
  %444 = vmatprep.mubr.f32.mxu0 0.0
  %445 = vmatmul.mubr.f32.gmra.mrb[0].mxu0 %v307
  %v446 = vpop.f32.mrb[0].mxu0
  %v447 = vadd.f32 %v253, %v446
  %v448 = vpop.f32.mrb[0].mxu0
  %449 = vmatprep.mubr.f32.mxu0 0.0
  %450 = vmatmul.mubr.f32.gmra.mrb[0].mxu0 %v310
  %v451 = vpop.f32.mrb[0].mxu0
  %v452 = vadd.f32 %v258, %v451
  %v453 = vpop.f32.mrb[0].mxu0
  %454 = vmatprep.mubr.f32.mxu0 0.0
  %455 = vmatmul.mubr.f32.gmra.mrb[0].mxu0 %v313
  %v456 = vpop.f32.mrb[0].mxu0
  %v457 = vadd.f32 %v263, %v456
  %v458 = vpop.f32.mrb[0].mxu0
  %459 = vdwg.mxu0
  %v460 = vld [vmem:[%s4] sm:$0x1]
  %v462 = vlaneseq
  %v463 = vshrl.u32 %v462, 7
  %v464 = vsub.s32 0, %v463
  %v465 = vrot.slane %v460, %v464
  %v467 = vadd.f32 %v382, %v465
  %v468 = vadd.f32 %v387, %v465
  %v469 = vadd.f32 %v392, %v465
  %v470 = vadd.f32 %v397, %v465
  %v471 = vadd.f32 %v402, %v465
  %v472 = vadd.f32 %v407, %v465
  %v473 = vadd.f32 %v412, %v465
  %v474 = vadd.f32 %v417, %v465
  %v475 = vadd.f32 %v422, %v465
  %v476 = vadd.f32 %v427, %v465
  %v477 = vadd.f32 %v432, %v465
  %v478 = vadd.f32 %v437, %v465
  %v479 = vadd.f32 %v442, %v465
  %v480 = vadd.f32 %v447, %v465
  %v481 = vadd.f32 %v452, %v465
  %v482 = vadd.f32 %v457, %v465
  %v483 = vtanh.pop %v467
  %v484 = vtanh.pop %v468
  %v485 = vtanh.pop %v469
  %v486 = vtanh.pop %v470
  %v487 = vtanh.pop %v471
  %v488 = vtanh.pop %v472
  %v489 = vtanh.pop %v473
  %v490 = vtanh.pop %v474
  %v491 = vtanh.pop %v475
  %v492 = vtanh.pop %v476
  %v493 = vtanh.pop %v477
  %v494 = vtanh.pop %v478
  %v495 = vtanh.pop %v479
  %v496 = vtanh.pop %v480
  %v497 = vtanh.pop %v481
  %v498 = vtanh.pop %v482
  %v499 = vld [vmem:[%s5] sm:$0xff]
  %v500 = vld [vmem:[%s5 + $0x8] sm:$0xff]
  %v501 = vld [vmem:[%s5 + $0x10] sm:$0xff]
  %v502 = vld [vmem:[%s5 + $0x18] sm:$0xff]
  %v503 = vld [vmem:[%s5 + $0x20] sm:$0xff]
  %v504 = vld [vmem:[%s5 + $0x28] sm:$0xff]
  %v505 = vld [vmem:[%s5 + $0x30] sm:$0xff]
  %v506 = vld [vmem:[%s5 + $0x38] sm:$0xff]
  %v507 = vld [vmem:[%s5 + $0x40] sm:$0xff]
  %v508 = vld [vmem:[%s5 + $0x48] sm:$0xff]
  %v509 = vld [vmem:[%s5 + $0x50] sm:$0xff]
  %v510 = vld [vmem:[%s5 + $0x58] sm:$0xff]
  %v511 = vld [vmem:[%s5 + $0x60] sm:$0xff]
  %v512 = vld [vmem:[%s5 + $0x68] sm:$0xff]
  %v513 = vld [vmem:[%s5 + $0x70] sm:$0xff]
  %v514 = vld [vmem:[%s5 + $0x78] sm:$0xff]
  %v515 = vld [vmem:[%s6] sm:$0x1]
  %v517 = vlaneseq
  %v518 = vshrl.u32 %v517, 7
  %v519 = vsub.s32 0, %v518
  %v520 = vrot.slane %v515, %v519
  %522 = vmatprep.subr.mxu0 0.0
  %523 = vmatpush1.msra.mxu0 %v499
  %524 = vmatprep.subr.mxu0 0.0
  %525 = vmatpush1.msra.mxu0 %v500
  %526 = vmatprep.subr.mxu0 0.0
  %527 = vmatpush1.msra.mxu0 %v501
  %528 = vmatprep.subr.mxu0 0.0
  %529 = vmatpush1.msra.mxu0 %v502
  %530 = vmatprep.subr.mxu0 0.0
  %531 = vmatpush1.msra.mxu0 %v503
  %532 = vmatprep.subr.mxu0 0.0
  %533 = vmatpush1.msra.mxu0 %v504
  %534 = vmatprep.subr.mxu0 0.0
  %535 = vmatpush1.msra.mxu0 %v505
  %536 = vmatprep.subr.mxu0 0.0
  %537 = vmatpush1.msra.mxu0 %v506
  %538 = vmatprep.subr.mxu0 0.0
  %539 = vmatpush1.msra.mxu0 %v507
  %540 = vmatprep.subr.mxu0 0.0
  %541 = vmatpush1.msra.mxu0 %v508
  %542 = vmatprep.subr.mxu0 0.0
  %543 = vmatpush1.msra.mxu0 %v509
  %544 = vmatprep.subr.mxu0 0.0
  %545 = vmatpush1.msra.mxu0 %v510
  %546 = vmatprep.subr.mxu0 0.0
  %547 = vmatpush1.msra.mxu0 %v511
  %548 = vmatprep.subr.mxu0 0.0
  %549 = vmatpush1.msra.mxu0 %v512
  %550 = vmatprep.subr.mxu0 0.0
  %551 = vmatpush1.msra.mxu0 %v513
  %552 = vmatprep.subr.mxu0 0.0
  %553 = vmatpush1.msra.mxu0 %v514
  %554 = vmatprep.subr.mxu0 0.0
  %555 = vmatpush1.msra.mxu0 0.0
  %556 = vmatprep.subr.mxu0 0.0
  %557 = vmatpush1.msra.mxu0 0.0
  %558 = vmatprep.subr.mxu0 0.0
  %559 = vmatpush1.msra.mxu0 0.0
  %560 = vmatprep.subr.mxu0 0.0
  %561 = vmatpush1.msra.mxu0 0.0
  %562 = vmatprep.subr.mxu0 0.0
  %563 = vmatpush1.msra.mxu0 0.0
  %564 = vmatprep.subr.mxu0 0.0
  %565 = vmatpush1.msra.mxu0 0.0
  %566 = vmatprep.subr.mxu0 0.0
  %567 = vmatpush1.msra.mxu0 0.0
  %568 = vmatprep.subr.mxu0 0.0
  %569 = vmatpush1.msra.mxu0 0.0
  %570 = vmatprep.subr.mxu0 0.0
  %571 = vmatpush1.msra.mxu0 0.0
  %572 = vmatprep.subr.mxu0 0.0
  %573 = vmatpush1.msra.mxu0 0.0
  %574 = vmatprep.subr.mxu0 0.0
  %575 = vmatpush1.msra.mxu0 0.0
  %576 = vmatprep.subr.mxu0 0.0
  %577 = vmatpush1.msra.mxu0 0.0
  %578 = vmatprep.subr.mxu0 0.0
  %579 = vmatpush1.msra.mxu0 0.0
  %580 = vmatprep.subr.mxu0 0.0
  %581 = vmatpush1.msra.mxu0 0.0
  %582 = vmatprep.subr.mxu0 0.0
  %583 = vmatpush1.msra.mxu0 0.0
  %584 = vmatprep.subr.mxu0 0.0
  %585 = vmatpush1.msra.mxu0 0.0
  %586 = vmatprep.mubr.f32.mxu0 0.0
  %587 = vmatmul.mubr.f32.gmra.mrb[0].mxu0 %v483
  %v588 = vpop.f32.mrb[0].mxu0
  %v589 = vadd.f32 %v520, %v588
  %v590 = vpop.f32.mrb[0].mxu0
  %591 = vmatprep.mubr.f32.mxu0 0.0
  %592 = vmatmul.mubr.f32.gmra.mrb[0].mxu0 %v484
  %v593 = vpop.f32.mrb[0].mxu0
  %v594 = vadd.f32 %v520, %v593
  %v595 = vpop.f32.mrb[0].mxu0
  %596 = vmatprep.mubr.f32.mxu0 0.0
  %597 = vmatmul.mubr.f32.gmra.mrb[0].mxu0 %v485
  %v598 = vpop.f32.mrb[0].mxu0
  %v599 = vadd.f32 %v520, %v598
  %v600 = vpop.f32.mrb[0].mxu0
  %601 = vmatprep.mubr.f32.mxu0 0.0
  %602 = vmatmul.mubr.f32.gmra.mrb[0].mxu0 %v486
  %v603 = vpop.f32.mrb[0].mxu0
  %v604 = vadd.f32 %v520, %v603
  %v605 = vpop.f32.mrb[0].mxu0
  %606 = vmatprep.mubr.f32.mxu0 0.0
  %607 = vmatmul.mubr.f32.gmra.mrb[0].mxu0 %v487
  %v608 = vpop.f32.mrb[0].mxu0
  %v609 = vadd.f32 %v520, %v608
  %v610 = vpop.f32.mrb[0].mxu0
  %611 = vmatprep.mubr.f32.mxu0 0.0
  %612 = vmatmul.mubr.f32.gmra.mrb[0].mxu0 %v488
  %v613 = vpop.f32.mrb[0].mxu0
  %v614 = vadd.f32 %v520, %v613
  %v615 = vpop.f32.mrb[0].mxu0
  %616 = vmatprep.mubr.f32.mxu0 0.0
  %617 = vmatmul.mubr.f32.gmra.mrb[0].mxu0 %v489
  %v618 = vpop.f32.mrb[0].mxu0
  %v619 = vadd.f32 %v520, %v618
  %v620 = vpop.f32.mrb[0].mxu0
  %621 = vmatprep.mubr.f32.mxu0 0.0
  %622 = vmatmul.mubr.f32.gmra.mrb[0].mxu0 %v490
  %v623 = vpop.f32.mrb[0].mxu0
  %v624 = vadd.f32 %v520, %v623
  %v625 = vpop.f32.mrb[0].mxu0
  %626 = vmatprep.mubr.f32.mxu0 0.0
  %627 = vmatmul.mubr.f32.gmra.mrb[0].mxu0 %v491
  %v628 = vpop.f32.mrb[0].mxu0
  %v629 = vadd.f32 %v520, %v628
  %v630 = vpop.f32.mrb[0].mxu0
  %631 = vmatprep.mubr.f32.mxu0 0.0
  %632 = vmatmul.mubr.f32.gmra.mrb[0].mxu0 %v492
  %v633 = vpop.f32.mrb[0].mxu0
  %v634 = vadd.f32 %v520, %v633
  %v635 = vpop.f32.mrb[0].mxu0
  %636 = vmatprep.mubr.f32.mxu0 0.0
  %637 = vmatmul.mubr.f32.gmra.mrb[0].mxu0 %v493
  %v638 = vpop.f32.mrb[0].mxu0
  %v639 = vadd.f32 %v520, %v638
  %v640 = vpop.f32.mrb[0].mxu0
  %641 = vmatprep.mubr.f32.mxu0 0.0
  %642 = vmatmul.mubr.f32.gmra.mrb[0].mxu0 %v494
  %v643 = vpop.f32.mrb[0].mxu0
  %v644 = vadd.f32 %v520, %v643
  %v645 = vpop.f32.mrb[0].mxu0
  %646 = vmatprep.mubr.f32.mxu0 0.0
  %647 = vmatmul.mubr.f32.gmra.mrb[0].mxu0 %v495
  %v648 = vpop.f32.mrb[0].mxu0
  %v649 = vadd.f32 %v520, %v648
  %v650 = vpop.f32.mrb[0].mxu0
  %651 = vmatprep.mubr.f32.mxu0 0.0
  %652 = vmatmul.mubr.f32.gmra.mrb[0].mxu0 %v496
  %v653 = vpop.f32.mrb[0].mxu0
  %v654 = vadd.f32 %v520, %v653
  %v655 = vpop.f32.mrb[0].mxu0
  %656 = vmatprep.mubr.f32.mxu0 0.0
  %657 = vmatmul.mubr.f32.gmra.mrb[0].mxu0 %v497
  %v658 = vpop.f32.mrb[0].mxu0
  %v659 = vadd.f32 %v520, %v658
  %v660 = vpop.f32.mrb[0].mxu0
  %661 = vmatprep.mubr.f32.mxu0 0.0
  %662 = vmatmul.mubr.f32.gmra.mrb[0].mxu0 %v498
  %v663 = vpop.f32.mrb[0].mxu0
  %v664 = vadd.f32 %v520, %v663
  %v665 = vpop.f32.mrb[0].mxu0
  %666 = vdwg.mxu0
  %v667 = vtanh.pop %v589
  %v668 = vtanh.pop %v594
  %v669 = vtanh.pop %v599
  %v670 = vtanh.pop %v604
  %v671 = vtanh.pop %v609
  %v672 = vtanh.pop %v614
  %v673 = vtanh.pop %v619
  %v674 = vtanh.pop %v624
  %v675 = vtanh.pop %v629
  %v676 = vtanh.pop %v634
  %v677 = vtanh.pop %v639
  %v678 = vtanh.pop %v644
  %v679 = vtanh.pop %v649
  %v680 = vtanh.pop %v654
  %v681 = vtanh.pop %v659
  %v682 = vtanh.pop %v664
  %v683 = vld [vmem:[%s7] sm:$0x1]
  %v685 = vlaneseq
  %v686 = vshrl.u32 %v685, 7
  %v687 = vsub.s32 0, %v686
  %v688 = vrot.slane %v683, %v687
  %v690 = vmul.f32 %v667, %v688
  %v691 = vmul.f32 %v668, %v688
  %v692 = vmul.f32 %v669, %v688
  %v693 = vmul.f32 %v670, %v688
  %v694 = vmul.f32 %v671, %v688
  %v695 = vmul.f32 %v672, %v688
  %v696 = vmul.f32 %v673, %v688
  %v697 = vmul.f32 %v674, %v688
  %v698 = vmul.f32 %v675, %v688
  %v699 = vmul.f32 %v676, %v688
  %v700 = vmul.f32 %v677, %v688
  %v701 = vmul.f32 %v678, %v688
  %v702 = vmul.f32 %v679, %v688
  %v703 = vmul.f32 %v680, %v688
  %v704 = vmul.f32 %v681, %v688
  %v705 = vmul.f32 %v682, %v688
  %706 = vadd.xlane.f32.xlu0 %v690
  %v707 = vpop.xlane.xlu0 %706
  %708 = vadd.xlane.f32.xlu0 %v691
  %v709 = vpop.xlane.xlu0 %708
  %710 = vadd.xlane.f32.xlu0 %v692
  %v711 = vpop.xlane.xlu0 %710
  %712 = vadd.xlane.f32.xlu0 %v693
  %v713 = vpop.xlane.xlu0 %712
  %714 = vadd.xlane.f32.xlu0 %v694
  %v715 = vpop.xlane.xlu0 %714
  %716 = vadd.xlane.f32.xlu0 %v695
  %v717 = vpop.xlane.xlu0 %716
  %718 = vadd.xlane.f32.xlu0 %v696
  %v719 = vpop.xlane.xlu0 %718
  %720 = vadd.xlane.f32.xlu0 %v697
  %v721 = vpop.xlane.xlu0 %720
  %722 = vadd.xlane.f32.xlu0 %v698
  %v723 = vpop.xlane.xlu0 %722
  %724 = vadd.xlane.f32.xlu0 %v699
  %v725 = vpop.xlane.xlu0 %724
  %726 = vadd.xlane.f32.xlu0 %v700
  %v727 = vpop.xlane.xlu0 %726
  %728 = vadd.xlane.f32.xlu0 %v701
  %v729 = vpop.xlane.xlu0 %728
  %730 = vadd.xlane.f32.xlu0 %v702
  %v731 = vpop.xlane.xlu0 %730
  %732 = vadd.xlane.f32.xlu0 %v703
  %v733 = vpop.xlane.xlu0 %732
  %734 = vadd.xlane.f32.xlu0 %v704
  %v735 = vpop.xlane.xlu0 %734
  %736 = vadd.xlane.f32.xlu0 %v705
  %v737 = vpop.xlane.xlu0 %736
  %s738 = sld [smem:[#allocation2]]
  %v739 = vstv %s738
  %v740 = vadd.f32 %v707, %v739
  %v741 = vadd.f32 %v709, %v739
  %v742 = vadd.f32 %v711, %v739
  %v743 = vadd.f32 %v713, %v739
  %v744 = vadd.f32 %v715, %v739
  %v745 = vadd.f32 %v717, %v739
  %v746 = vadd.f32 %v719, %v739
  %v747 = vadd.f32 %v721, %v739
  %v748 = vadd.f32 %v723, %v739
  %v749 = vadd.f32 %v725, %v739
  %v750 = vadd.f32 %v727, %v739
  %v751 = vadd.f32 %v729, %v739
  %v752 = vadd.f32 %v731, %v739
  %v753 = vadd.f32 %v733, %v739
  %v754 = vadd.f32 %v735, %v739
  %v755 = vadd.f32 %v737, %v739
  %v772 = vlaneseq
  %v773 = vand.u32 %v772, 127
  %v774 = vlaneseq
  %v775 = vshrl.u32 %v774, 7
  %v776 = vsub.s32 %v773, %v775
  %v777 = vrot.slane %v740, %v776
  %v778 = vadd.s32 %v773, 4294967288
  %v779 = vlaneseq
  %v780 = vshrl.u32 %v779, 7
  %v781 = vsub.s32 %v778, %v780
  %v782 = vrot.slane %v741, %v781
  %vm783 = vcmask 130112
  %v784 = vsel %vm783, %v782, %v777
  %v785 = vadd.s32 %v773, 4294967280
  %v786 = vlaneseq
  %v787 = vshrl.u32 %v786, 7
  %v788 = vsub.s32 %v785, %v787
  %v789 = vrot.slane %v742, %v788
  %vm790 = vcmask 195712
  %v791 = vsel %vm790, %v789, %v784
  %v792 = vadd.s32 %v773, 4294967272
  %v793 = vlaneseq
  %v794 = vshrl.u32 %v793, 7
  %v795 = vsub.s32 %v792, %v794
  %v796 = vrot.slane %v743, %v795
  %vm797 = vcmask 261312
  %v798 = vsel %vm797, %v796, %v791
  %v799 = vadd.s32 %v773, 4294967264
  %v800 = vlaneseq
  %v801 = vshrl.u32 %v800, 7
  %v802 = vsub.s32 %v799, %v801
  %v803 = vrot.slane %v744, %v802
  %vm804 = vcmask 326912
  %v805 = vsel %vm804, %v803, %v798
  %v806 = vadd.s32 %v773, 4294967256
  %v807 = vlaneseq
  %v808 = vshrl.u32 %v807, 7
  %v809 = vsub.s32 %v806, %v808
  %v810 = vrot.slane %v745, %v809
  %vm811 = vcmask 392512
  %v812 = vsel %vm811, %v810, %v805
  %v813 = vadd.s32 %v773, 4294967248
  %v814 = vlaneseq
  %v815 = vshrl.u32 %v814, 7
  %v816 = vsub.s32 %v813, %v815
  %v817 = vrot.slane %v746, %v816
  %vm818 = vcmask 458112
  %v819 = vsel %vm818, %v817, %v812
  %v820 = vadd.s32 %v773, 4294967240
  %v821 = vlaneseq
  %v822 = vshrl.u32 %v821, 7
  %v823 = vsub.s32 %v820, %v822
  %v824 = vrot.slane %v747, %v823
  %vm825 = vcmask 523712
  %v826 = vsel %vm825, %v824, %v819
  %v827 = vadd.s32 %v773, 4294967232
  %v828 = vlaneseq
  %v829 = vshrl.u32 %v828, 7
  %v830 = vsub.s32 %v827, %v829
  %v831 = vrot.slane %v748, %v830
  %vm832 = vcmask 589312
  %v833 = vsel %vm832, %v831, %v826
  %v834 = vadd.s32 %v773, 4294967224
  %v835 = vlaneseq
  %v836 = vshrl.u32 %v835, 7
  %v837 = vsub.s32 %v834, %v836
  %v838 = vrot.slane %v749, %v837
  %vm839 = vcmask 654912
  %v840 = vsel %vm839, %v838, %v833
  %v841 = vadd.s32 %v773, 4294967216
  %v842 = vlaneseq
  %v843 = vshrl.u32 %v842, 7
  %v844 = vsub.s32 %v841, %v843
  %v845 = vrot.slane %v750, %v844
  %vm846 = vcmask 720512
  %v847 = vsel %vm846, %v845, %v840
  %v848 = vadd.s32 %v773, 4294967208
  %v849 = vlaneseq
  %v850 = vshrl.u32 %v849, 7
  %v851 = vsub.s32 %v848, %v850
  %v852 = vrot.slane %v751, %v851
  %vm853 = vcmask 786112
  %v854 = vsel %vm853, %v852, %v847
  %v855 = vadd.s32 %v773, 4294967200
  %v856 = vlaneseq
  %v857 = vshrl.u32 %v856, 7
  %v858 = vsub.s32 %v855, %v857
  %v859 = vrot.slane %v752, %v858
  %vm860 = vcmask 851712
  %v861 = vsel %vm860, %v859, %v854
  %v862 = vadd.s32 %v773, 4294967192
  %v863 = vlaneseq
  %v864 = vshrl.u32 %v863, 7
  %v865 = vsub.s32 %v862, %v864
  %v866 = vrot.slane %v753, %v865
  %vm867 = vcmask 917312
  %v868 = vsel %vm867, %v866, %v861
  %v869 = vadd.s32 %v773, 4294967184
  %v870 = vlaneseq
  %v871 = vshrl.u32 %v870, 7
  %v872 = vsub.s32 %v869, %v871
  %v873 = vrot.slane %v754, %v872
  %vm874 = vcmask 982912
  %v875 = vsel %vm874, %v873, %v868
  %v876 = vadd.s32 %v773, 4294967176
  %v877 = vlaneseq
  %v878 = vshrl.u32 %v877, 7
  %v879 = vsub.s32 %v876, %v878
  %v880 = vrot.slane %v755, %v879
  %vm881 = vcmask 1048512
  %v882 = vsel %vm881, %v880, %v875
  %884 = vst [vmem:[%s9] sm:$0x1] %v882
  // Predicated region
  $region38: #{gail_discrim_forward.1} parent=0 // pred_check
    _
  $region39: #{gail_discrim_forward.1} parent=0 // pred_check_branch
    %886 = sbr.rel (0) target = $region41
  $region40: #{gail_discrim_forward.1} parent=0 // pred_region
    _
  $region41: #{gail_discrim_forward.1} parent=0 // pred_fallthru
    _
  // Predicated region
  $region42: #{gail_discrim_forward.1} parent=0 // pred_check
    _
  $region43: #{gail_discrim_forward.1} parent=0 // pred_check_branch
    %888 = sbr.rel (0) target = $region45
  $region44: #{gail_discrim_forward.1} parent=0 // pred_region
    _
  $region45: #{gail_discrim_forward.1} parent=0 // pred_fallthru
    _

</llo_original>
